<compile_context>
chip_gen: v6e
topology: v6e:2x2x1
jax: 0.10.0
libtpu: 0.0.40
codegen_flags: <defaults>
</compile_context>

<pallas_src>
import math

import jax
import jax.numpy as jnp
from jax.experimental import pallas as pl
from jax.experimental.pallas import tpu as pltpu


# ------------------------------------------------------------------ kernel ---
def _memfuncs_kernel(x_ref, mean_ref, scale_ref, out_ref):
    # x_ref:     (TR, G)    f32  row tile of the flattened input (feature = lane % F)
    # mean_ref:  (3, 1, G)  f32  per-MF lane pattern of means        (VMEM resident)
    # scale_ref: (1, G)     f32  lane pattern of -1/(2*sigma^2)      (VMEM resident)
    # out_ref:   (3, TR, G)      one lane-dense (TR, G) slab per membership fn
    x = x_ref[...]
    s = scale_ref[...]                                   # (1, G) broadcasts over rows
    for m in range(3):                                   # static unroll over the 3 MFs
        d = x - mean_ref[m]                              # (TR, G)  VPU
        out_ref[m] = jnp.exp(d * d * s).astype(out_ref.dtype)   # VPU muls + EUP exp


# ----------------------------------------------------------------- helpers ---
def _round_up(v, m):
    return ((v + m - 1) // m) * m


def _lane_granule(f):
    # Smallest multiple of 128 into which the per-feature pattern tiles evenly.
    return 128 * f // math.gcd(128, f)


def _vmem_working_set_budget():
    # Target double-buffered footprint ~ VMEM/4, capped at 32 MiB (fits the
    # scoped default everywhere and leaves headroom on v7x's 64 MiB parts).
    try:
        cap = pltpu.get_tpu_info().vmem_capacity_bytes
    except Exception:
        cap = 64 * 1024 * 1024          # conservative fallback (v7x per-core VMEM)
    return max(8 * 1024 * 1024, min(cap // 4, 32 * 1024 * 1024))


def _choose_row_tile(rows, g, budget_bytes):
    # Double-buffered per-step footprint: 2 * (x: 4*tr*g + out: 12*tr*g) = 32*tr*g.
    tr = max(8, (budget_bytes // (32 * g)) // 8 * 8)
    if rows >= 16:
        # Keep at least 2 grid steps so both v7x TensorCores get work.
        tr = min(tr, _round_up(pl.cdiv(rows, 2), 8))
    if tr >= rows:
        return rows                 # single full-extent block (any row count is legal)
    return tr                       # multiple of 8; ragged last block is write-masked


# ----------------------------------------------------------------- forward ---
def memfuncs_forward(x, mean_lane, scale_lane, *, out_dtype=jnp.float32):
    """x: (N, F) f32; mean_lane: (3, 1, G) f32; scale_lane: (1, G) f32.

    Returns the lane-dense (3, N, F) membership tensor:
        out[m, n, f] = exp(-(x[n, f] - mean[f, m])^2 / (2 * sigma_f^2)).
    """
    n, f = x.shape
    g = mean_lane.shape[-1]
    assert mean_lane.shape == (3, 1, g) and scale_lane.shape == (1, g) and g % f == 0

    total = n * f
    rows = pl.cdiv(total, g)
    pad = rows * g - total

    x_flat = x.reshape(-1)                      # free (row-major contiguous view)
    if pad:
        # Only the ragged tail (< G elements) is padded — not the whole batch.
        x_flat = jnp.pad(x_flat, (0, pad))
    x2 = x_flat.reshape(rows, g)                # free

    budget = _vmem_working_set_budget()
    tr = _choose_row_tile(rows, g, budget)
    grid_r = pl.cdiv(rows, tr)
    vmem_need = 32 * tr * g + 32 * g            # double-buffered tiles + params

    out3 = pl.pallas_call(
        _memfuncs_kernel,
        out_shape=jax.ShapeDtypeStruct((3, rows, g), out_dtype),
        grid=(grid_r,),
        in_specs=[
            pl.BlockSpec((tr, g), lambda i: (i, 0)),        # x row tile
            pl.BlockSpec((3, 1, g), lambda i: (0, 0, 0)),   # means   (VMEM resident)
            pl.BlockSpec((1, g), lambda i: (0, 0)),         # scales  (VMEM resident)
        ],
        out_specs=pl.BlockSpec((3, tr, g), lambda i: (0, i, 0)),
        compiler_params=pltpu.CompilerParams(
            dimension_semantics=("parallel",),
            vmem_limit_bytes=max(32 * 1024 * 1024, vmem_need + 4 * 1024 * 1024),
        ),
    )(x2, mean_lane, scale_lane)

    out_flat = out3.reshape(3, rows * g)        # free
    if pad:
        out_flat = out_flat[:, :total]          # drops only the ragged tail
    return out_flat.reshape(3, n, f)            # free


# ------------------------------------------------------- module equivalent ---
class MemFuncs:
    """JAX/Pallas port of the PyTorch MemFuncs module.

    Per feature f: mean_f = X[:, f].mean(), sigma_f = X[:, f].std(ddof=1)
    (matches torch.std(unbiased=True)); three Gaussian MFs with means
    (mean_f - sigma_f, mean_f, mean_f + sigma_f) and sigma = sigma_f.

    __call__(X) returns the PyTorch layout (N, F, 3) by default.
    __call__(X, layout="3nf") returns the TPU-native lane-dense (3, N, F)
    tensor, skipping the (last-dim-3, TPU-hostile) compatibility transpose.
    """

    def __init__(self, X):
        X = jnp.asarray(X, dtype=jnp.float32)
        f = X.shape[1]
        mean = jnp.mean(X, axis=0)                                   # (F,)
        std = jnp.std(X, axis=0, ddof=1)                             # (F,)
        means = jnp.stack([mean - std, mean, mean + std], axis=0)    # (3, F)
        # Precompute -1/(2*sigma^2); sigma == 0 gives -inf, reproducing the
        # PyTorch degenerate behaviour (NaN at the mean, 0 elsewhere).
        scale = -1.0 / (2.0 * std * std)                             # (F,)

        g = _lane_granule(f)                                         # lcm(128, F)
        reps = g // f
        # Lane l of the flattened (N*F) view holds feature l % F.
        self.num_features = f
        self.mean_lane = jnp.tile(means, (1, reps)).reshape(3, 1, g)  # (3, 1, G)
        self.scale_lane = jnp.tile(scale, (reps,)).reshape(1, g)      # (1, G)

    def __call__(self, X, layout="nf3", out_dtype=jnp.float32):
        X = jnp.asarray(X, dtype=jnp.float32)
        assert X.shape[1] == self.num_features
        out_3nf = memfuncs_forward(X, self.mean_lane, self.scale_lane,
                                   out_dtype=out_dtype)
        if layout == "3nf":
            return out_3nf          # lane-dense, no extra HBM pass
        # PyTorch-compatible (N, F, 3); one XLA transpose outside the kernel.
        return jnp.transpose(out_3nf, (1, 2, 0))


# -------------------------------------------------------------------- main ---
if __name__ == "__main__":
    key = jax.random.PRNGKey(0)
    k0, k1 = jax.random.split(key)

    N, F = 8, 4                                       # small shapes: batch=8, features=4
    x = jax.random.normal(k0, (N, F), dtype=jnp.float32) * 2.0 + 0.5

    model = MemFuncs(x)
    out = jax.block_until_ready(model(x))             # PyTorch layout (N, F, 3)
    assert out.shape == (N, F, 3)

    # Pure-JAX reference (same math as the PyTorch forward).
    mean = jnp.mean(x, axis=0)
    std = jnp.std(x, axis=0, ddof=1)
    means_ref = jnp.stack([mean - std, mean, mean + std], axis=1)     # (F, 3)
    ref = jnp.exp(-((x[:, :, None] - means_ref[None, :, :]) ** 2)
                  / (2.0 * std[None, :, None] ** 2))
    assert jnp.allclose(out, ref, atol=1e-5, rtol=1e-5)

    # TPU-native lane-dense layout (no compatibility transpose).
    out_native = jax.block_until_ready(model(x, layout="3nf"))
    assert out_native.shape == (3, N, F)
    assert jnp.allclose(jnp.transpose(out_native, (1, 2, 0)), ref, atol=1e-5, rtol=1e-5)

    # Ragged path: N*F not a multiple of the 128-lane granule.
    x2 = jax.random.normal(k1, (37, F), dtype=jnp.float32) * 2.0 + 0.5
    out2 = jax.block_until_ready(model(x2))
    ref2 = jnp.exp(-((x2[:, :, None] - means_ref[None, :, :]) ** 2)
                   / (2.0 * std[None, :, None] ** 2))
    assert out2.shape == (37, F, 3)
    assert jnp.allclose(out2, ref2, atol=1e-5, rtol=1e-5)

    print("KERNEL_OK")
</pallas_src>

<mosaic_0001>
module attributes {stable_mosaic.version = 11 : i64} {
  func.func @_memfuncs_kernel(%arg0: i32, %arg1: memref<1x128xf32, #tpu.memory_space<vmem>>, %arg2: memref<3x1x128xf32, #tpu.memory_space<vmem>>, %arg3: memref<1x128xf32, #tpu.memory_space<vmem>>, %arg4: memref<3x1x128xf32, #tpu.memory_space<vmem>>) attributes {dimension_semantics = [#tpu.dimension_semantics<parallel>], iteration_bounds = array<i64: 1>, scalar_prefetch = 0 : i64, scratch_operands = 0 : i64, tpu.core_type = #tpu.core_type<tc>, window_params = [{transform_indices = @transform_0, window_bounds = array<i64: 1, 128>}, {pipeline_mode = #tpu.pipeline_mode<synchronous>, transform_indices = @transform_1, window_bounds = array<i64: 3, 1, 128>}, {pipeline_mode = #tpu.pipeline_mode<synchronous>, transform_indices = @transform_2, window_bounds = array<i64: 1, 128>}, {transform_indices = @transform_3, window_bounds = array<i64: 3, 1, 128>}]} {
    %c0 = arith.constant 0 : index
    %c0_0 = arith.constant 0 : index
    %0 = vector.load %arg1[%c0, %c0_0] : memref<1x128xf32, #tpu.memory_space<vmem>>, vector<1x128xf32>
    %c0_1 = arith.constant 0 : index
    %c0_2 = arith.constant 0 : index
    %1 = vector.load %arg3[%c0_1, %c0_2] : memref<1x128xf32, #tpu.memory_space<vmem>>, vector<1x128xf32>
    %c0_3 = arith.constant 0 : index
    %c0_4 = arith.constant 0 : index
    %c0_5 = arith.constant 0 : index
    %2 = vector.load %arg2[%c0_3, %c0_4, %c0_5] : memref<3x1x128xf32, #tpu.memory_space<vmem>>, vector<1x1x128xf32>
    %3 = vector.shape_cast %2 : vector<1x1x128xf32> to vector<1x128xf32>
    %4 = arith.subf %0, %3 : vector<1x128xf32>
    %5 = arith.mulf %4, %4 : vector<1x128xf32>
    %6 = arith.mulf %5, %1 : vector<1x128xf32>
    %7 = math.exp %6 : vector<1x128xf32>
    %c0_6 = arith.constant 0 : index
    %c0_7 = arith.constant 0 : index
    %c0_8 = arith.constant 0 : index
    %8 = vector.load %arg4[%c0_6, %c0_7, %c0_8] : memref<3x1x128xf32, #tpu.memory_space<vmem>>, vector<1x1x128xf32>
    %9 = vector.shape_cast %8 : vector<1x1x128xf32> to vector<1x128xf32>
    %10 = vector.shape_cast %7 : vector<1x128xf32> to vector<1x1x128xf32>
    tpu.vector_store %arg4[%c0_6, %c0_7, %c0_8], %10 {strides = array<i32>} : memref<3x1x128xf32, #tpu.memory_space<vmem>>, vector<1x1x128xf32>,
    %c1 = arith.constant 1 : index
    %c0_9 = arith.constant 0 : index
    %c0_10 = arith.constant 0 : index
    %11 = vector.load %arg2[%c1, %c0_9, %c0_10] : memref<3x1x128xf32, #tpu.memory_space<vmem>>, vector<1x1x128xf32>
    %12 = vector.shape_cast %11 : vector<1x1x128xf32> to vector<1x128xf32>
    %13 = arith.subf %0, %12 : vector<1x128xf32>
    %14 = arith.mulf %13, %13 : vector<1x128xf32>
    %15 = arith.mulf %14, %1 : vector<1x128xf32>
    %16 = math.exp %15 : vector<1x128xf32>
    %c1_11 = arith.constant 1 : index
    %c0_12 = arith.constant 0 : index
    %c0_13 = arith.constant 0 : index
    %17 = vector.load %arg4[%c1_11, %c0_12, %c0_13] : memref<3x1x128xf32, #tpu.memory_space<vmem>>, vector<1x1x128xf32>
    %18 = vector.shape_cast %17 : vector<1x1x128xf32> to vector<1x128xf32>
    %19 = vector.shape_cast %16 : vector<1x128xf32> to vector<1x1x128xf32>
    tpu.vector_store %arg4[%c1_11, %c0_12, %c0_13], %19 {strides = array<i32>} : memref<3x1x128xf32, #tpu.memory_space<vmem>>, vector<1x1x128xf32>,
    %c2 = arith.constant 2 : index
    %c0_14 = arith.constant 0 : index
    %c0_15 = arith.constant 0 : index
    %20 = vector.load %arg2[%c2, %c0_14, %c0_15] : memref<3x1x128xf32, #tpu.memory_space<vmem>>, vector<1x1x128xf32>
    %21 = vector.shape_cast %20 : vector<1x1x128xf32> to vector<1x128xf32>
    %22 = arith.subf %0, %21 : vector<1x128xf32>
    %23 = arith.mulf %22, %22 : vector<1x128xf32>
    %24 = arith.mulf %23, %1 : vector<1x128xf32>
    %25 = math.exp %24 : vector<1x128xf32>
    %c2_16 = arith.constant 2 : index
    %c0_17 = arith.constant 0 : index
    %c0_18 = arith.constant 0 : index
    %26 = vector.load %arg4[%c2_16, %c0_17, %c0_18] : memref<3x1x128xf32, #tpu.memory_space<vmem>>, vector<1x1x128xf32>
    %27 = vector.shape_cast %26 : vector<1x1x128xf32> to vector<1x128xf32>
    %28 = vector.shape_cast %25 : vector<1x128xf32> to vector<1x1x128xf32>
    tpu.vector_store %arg4[%c2_16, %c0_17, %c0_18], %28 {strides = array<i32>} : memref<3x1x128xf32, #tpu.memory_space<vmem>>, vector<1x1x128xf32>,
    return
  }
  func.func @transform_0(%arg0: i32) -> (i32, i32) {
    %c0_i32 = arith.constant 0 : i32
    %c0_i32_0 = arith.constant 0 : i32
    return %arg0, %c0_i32 : i32, i32
  }
  func.func @transform_1(%arg0: i32) -> (i32, i32, i32) {
    %c0_i32 = arith.constant 0 : i32
    %c0_i32_0 = arith.constant 0 : i32
    %c0_i32_1 = arith.constant 0 : i32
    %c0_i32_2 = arith.constant 0 : i32
    return %c0_i32, %c0_i32_0, %c0_i32_1 : i32, i32, i32
  }
  func.func @transform_2(%arg0: i32) -> (i32, i32) {
    %c0_i32 = arith.constant 0 : i32
    %c0_i32_0 = arith.constant 0 : i32
    %c0_i32_1 = arith.constant 0 : i32
    return %c0_i32, %c0_i32_0 : i32, i32
  }
  func.func @transform_3(%arg0: i32) -> (i32, i32, i32) {
    %c0_i32 = arith.constant 0 : i32
    %c0_i32_0 = arith.constant 0 : i32
    %c0_i32_1 = arith.constant 0 : i32
    return %c0_i32, %arg0, %c0_i32_0 : i32, i32, i32
  }
}

</mosaic_0001>

<llo_original>
// kernel: tpu_custom_call.1
$region0: #{tpu_custom_call.1}
  #allocation0 [shape = 'u32[]', space=smem, size = 0x4, offset = 0x4, fixed_abs, tag = 'smem constant byte address 0x4 - core index']
  #allocation1 [shape = 'u32[144,128]{1,0:T(1,128)}', space=vmem, size = 0x12000, scoped, tag = 'internal scratch']
  %s0 = inlined_call_operand.hbm [shape: f32[1,128], index: 0, kind: input, shape index: {}]
  %s1 = inlined_call_operand.hbm [shape: f32[3,1,128], index: 1, kind: input, shape index: {}]
  %s2 = inlined_call_operand.vmem [shape: f32[1,128], index: 2, kind: input, shape index: {}]
  %s3 = inlined_call_operand.hbm [shape: f32[3,1,128], index: 3, kind: output, shape index: {}]
  %s4 = sld [smem:[#allocation0]]
  $region30: #{tpu_custom_call.1} parent=0
    _
  %s6 = ssub.s32 1, %s4
  %s7 = scalar_select 0, %s6, %s4
  $region1: #{tpu_custom_call.1} parent=0
    #allocation2 [shape = 'u8[512]{0}', space=vmem, size = 0x400, scoped, tag = 'input window, operand 0, single buffered']
    #allocation3 [shape = 's32[1]{0}', space=sflag, size = 0x4, scoped, tag = 'scoped memory for tpu_custom_call.1']
    #allocation4 [shape = 's32[1]{0}', space=sflag, size = 0x4, scoped, tag = 'scoped memory for tpu_custom_call.1']
    #allocation5 [shape = 'u8[1536]{0}', space=vmem, size = 0x800, scoped, tag = 'input window, operand 1, single buffered']
    #allocation6 [shape = 's32[1]{0}', space=sflag, size = 0x4, scoped, tag = 'scoped memory for tpu_custom_call.1']
    #allocation7 [shape = 'u8[1536]{0}', space=vmem, size = 0x800, scoped, tag = 'output window, operand 0, single buffered']
    %8 = vsyncpa [#allocation3], 0
    %9 = vsyncpa [#allocation6], 0
    %10 = vsyncpa [#allocation4], 0
    // Predicated region
    $region2: #{tpu_custom_call.1} parent=1 // pred_check
      _
    $region3: #{tpu_custom_call.1} parent=1 // pred_check_branch
      %12 = sbr.rel (0) target = $region5
    $region4: #{tpu_custom_call.1} parent=1 // pred_region
      %s14 = ssub.s32 16, 16
      %15 = vsyncadd [#allocation3], %s14
      %s17 = sshll.u32 [#allocation2], 4
      %s18 = int_to_ptr.vmem [resolvable:$true] %s17
      %20 = dma.hbm_to_vmem [thread:$0]  %s0, 16, %s18, [#allocation3]
    $region5: #{tpu_custom_call.1} parent=1 // pred_fallthru
      _
    // Predicated region
    $region6: #{tpu_custom_call.1} parent=1 // pred_check
      _
    $region7: #{tpu_custom_call.1} parent=1 // pred_check_branch
      %22 = sbr.rel (0) target = $region9
    $region8: #{tpu_custom_call.1} parent=1 // pred_region
      %s24 = ssub.s32 48, 48
      %25 = vsyncadd [#allocation6], %s24
      %s26 = sshll.u32 [#allocation5], 4
      %s27 = int_to_ptr.vmem [resolvable:$true] %s26
      %32 = dma.hbm_to_vmem [thread:$0]  %s1, 48, %s27, [#allocation6], 16, 16, 1
    $region9: #{tpu_custom_call.1} parent=1 // pred_fallthru
      _
    // Predicated region
    $region10: #{tpu_custom_call.1} parent=1 // pred_check
      _
    $region11: #{tpu_custom_call.1} parent=1 // pred_check_branch
      %34 = sbr.rel (0) target = $region13
    $region12: #{tpu_custom_call.1} parent=1 // pred_region
      _
    $region13: #{tpu_custom_call.1} parent=1 // pred_fallthru
      _
    // Predicated region
    $region14: #{tpu_custom_call.1} parent=1 // pred_check
      _
    $region15: #{tpu_custom_call.1} parent=1 // pred_check_branch
      %36 = sbr.rel (0) target = $region17
    $region16: #{tpu_custom_call.1} parent=1 // pred_region
      %37 = dma.done [#allocation3], 16
    $region17: #{tpu_custom_call.1} parent=1 // pred_fallthru
      _
    // Predicated region
    $region18: #{tpu_custom_call.1} parent=1 // pred_check
      _
    $region19: #{tpu_custom_call.1} parent=1 // pred_check_branch
      %39 = sbr.rel (0) target = $region21
    $region20: #{tpu_custom_call.1} parent=1 // pred_region
      %40 = dma.done [#allocation6], 48
    $region21: #{tpu_custom_call.1} parent=1 // pred_fallthru
      _
    %v41 = vld [vmem:[#allocation2] sm:$0x1]
    %v42 = vld [vmem:[%s2] sm:$0x1]
    %v43 = vld [vmem:[#allocation5] sm:$0x1]
    %v44 = vsub.f32 %v41, %v43
    %v45 = vmul.f32 %v44, %v44
    %v46 = vmul.f32 %v45, %v42
    %v47 = vmul.f32 %v46, 1.442695
    %v48 = vpow.pop %v47
    %49 = vst [vmem:[#allocation7] sm:$0x1] %v48
    %s50 = scalar_lea.vmem [#allocation5], 1
    %v51 = vld [vmem:[%s50] sm:$0x1]
    %v52 = vsub.f32 %v41, %v51
    %v53 = vmul.f32 %v52, %v52
    %v54 = vmul.f32 %v53, %v42
    %v55 = vmul.f32 %v54, 1.442695
    %v56 = vpow.pop %v55
    %s57 = scalar_lea.vmem [#allocation7], 1
    %58 = vst [vmem:[%s57] sm:$0x1] %v56
    %s59 = scalar_lea.vmem [#allocation5], 2
    %v60 = vld [vmem:[%s59] sm:$0x1]
    %v61 = vsub.f32 %v41, %v60
    %v62 = vmul.f32 %v61, %v61
    %v63 = vmul.f32 %v62, %v42
    %v64 = vmul.f32 %v63, 1.442695
    %v65 = vpow.pop %v64
    %s66 = scalar_lea.vmem [#allocation7], 2
    %67 = vst [vmem:[%s66] sm:$0x1] %v65
    // Predicated region
    $region22: #{tpu_custom_call.1} parent=1 // pred_check
      _
    $region23: #{tpu_custom_call.1} parent=1 // pred_check_branch
      %69 = sbr.rel (0) target = $region25
    $region24: #{tpu_custom_call.1} parent=1 // pred_region
      %s71 = ssub.s32 48, 48
      %72 = vsyncadd [#allocation4], %s71
      %s73 = sshll.u32 [#allocation7], 4
      %s74 = int_to_ptr.vmem [resolvable:$true] %s73
      %79 = dma.vmem_to_hbm [thread:$0]  %s74, 48, %s3, [#allocation4], 16, 16, 1
    $region25: #{tpu_custom_call.1} parent=1 // pred_fallthru
      _
    // Predicated region
    $region26: #{tpu_custom_call.1} parent=1 // pred_check
      _
    $region27: #{tpu_custom_call.1} parent=1 // pred_check_branch
      %81 = sbr.rel (0) target = $region29
    $region28: #{tpu_custom_call.1} parent=1 // pred_region
      %82 = dma.done [#allocation4], 48
    $region29: #{tpu_custom_call.1} parent=1 // pred_fallthru
      _
    %83 = vsyncpa [#allocation3], 1
    %84 = vsyncpa [#allocation6], 1
    %85 = vsyncpa [#allocation4], 1

</llo_original>
